<compile_context>
chip_gen: v6e
topology: v6e:2x2x1
jax: 0.10.0
libtpu: 0.0.40
codegen_flags: <defaults>
</compile_context>

<pallas_src>
import math
import jax
import jax.numpy as jnp
from jax.experimental import pallas as pl
from jax.experimental.pallas import tpu as pltpu

LANE = 128


def _round_up(v, m):
    return ((v + m - 1) // m) * m


# ------------------------------ fused kernel --------------------------------

def make_simplegcn_kernel(n_conv, n_lin):
    """Fused forward kernel for a fixed (c_depth, l_depth)."""

    def kernel(*refs):
        it = iter(refs)
        adj = next(it)[...]      # [N, N]   normalized adjacency (self-loops folded in)
        h = next(it)[...]        # [N, F]   node features
        s_oh = next(it)[...]     # [E, N]   one-hot of edge_index[0]
        d_oh = next(it)[...]     # [E, N]   one-hot of edge_index[1]

        # GCNConv layers: relu( Â @ (h @ W) + b )
        for _ in range(n_conv):
            w = next(it)[...]
            b = next(it)[...]
            hw = jnp.dot(h, w, preferred_element_type=jnp.float32)
            h = jnp.maximum(
                jnp.dot(adj, hw, preferred_element_type=jnp.float32) + b, 0.0)

        # Dense layers: relu(h @ W + b)
        for _ in range(n_lin):
            w = next(it)[...]
            b = next(it)[...]
            h = jnp.maximum(
                jnp.dot(h, w, preferred_element_type=jnp.float32) + b, 0.0)

        # F.dropout in eval mode -> identity

        wc_top = next(it)[...]   # [dim_pad, c_pad]  classifier rows for h[src]
        wc_bot = next(it)[...]   # [dim_pad, c_pad]  classifier rows for h[dst]
        bc = next(it)[...]       # [1, c_pad]

        out_ref = next(it)       # [E, c_pad]
        e_ref = next(it)         # [E, 2*dim_pad]

        # edge-row gather on the MXU
        h_src = jnp.dot(s_oh, h, preferred_element_type=jnp.float32)
        h_dst = jnp.dot(d_oh, h, preferred_element_type=jnp.float32)

        dim_pad = h.shape[1]
        e_ref[:, :dim_pad] = h_src          # lane-dense halves, no concat temp
        e_ref[:, dim_pad:] = h_dst

        out_ref[...] = (jnp.dot(h_src, wc_top, preferred_element_type=jnp.float32)
                        + jnp.dot(h_dst, wc_bot, preferred_element_type=jnp.float32)
                        + bc)

    return kernel


_VMEM = pl.BlockSpec(memory_space=pltpu.MemorySpace.VMEM)


# --------------------------------- glue -------------------------------------

def _normalized_adjacency(edge_index, n):
    """Dense GCN adjacency: self-loops + symmetric D^-1/2 A D^-1/2 normalization."""
    src, dst = edge_index[0], edge_index[1]
    adj = jnp.zeros((n, n), jnp.float32).at[dst, src].add(1.0)
    # PyG add_remaining_self_loops: every node ends up with exactly one self-loop
    # of weight 1 (duplicates collapsed).
    adj = jnp.where(jnp.eye(n, dtype=bool), 1.0, adj)
    deg = adj.sum(axis=1)
    d_inv_sqrt = jnp.where(deg > 0, jax.lax.rsqrt(deg), 0.0)
    return d_inv_sqrt[:, None] * adj * d_inv_sqrt[None, :]


def simplegcn_forward(x, edge_index, params, *, dim, num_classes, batch=None):
    """Eval-mode SimpleGCN forward. Returns (out [E, num_classes], e [E, 2*dim])."""
    del batch  # unused by the reference forward
    n = x.shape[0]
    e_cnt = edge_index.shape[1]
    dim_pad = _round_up(dim, LANE)
    c_pad = _round_up(num_classes, LANE)

    # data-dependent scatter / normalization: plain-JAX glue, done once
    adj_norm = _normalized_adjacency(edge_index, n)
    s_oh = jax.nn.one_hot(edge_index[0], n, dtype=jnp.float32)   # [E, N]
    d_oh = jax.nn.one_hot(edge_index[1], n, dtype=jnp.float32)   # [E, N]

    operands = [adj_norm, x, s_oh, d_oh]
    for (w, b) in params["convs"]:
        operands += [w, b]
    for (w, b) in params["lins"]:
        operands += [w, b]
    operands += list(params["classifier"])   # wc_top, wc_bot, bc

    out_pad, e_pad = pl.pallas_call(
        make_simplegcn_kernel(len(params["convs"]), len(params["lins"])),
        out_shape=(jax.ShapeDtypeStruct((e_cnt, c_pad), jnp.float32),
                   jax.ShapeDtypeStruct((e_cnt, 2 * dim_pad), jnp.float32)),
        in_specs=[_VMEM] * len(operands),
        out_specs=(_VMEM, _VMEM),
    )(*operands)

    out = out_pad[:, :num_classes]
    e = jnp.concatenate([e_pad[:, :dim], e_pad[:, dim_pad:dim_pad + dim]], axis=1)
    return out, e


# ------------------------------- parameters ---------------------------------

def _linear_init(key, fan_in, fan_out):
    """PyTorch-style Linear init; weight stored [in, out]."""
    kw, kb = jax.random.split(key)
    bound_w = math.sqrt(3.0 / fan_in)           # kaiming_uniform(a=sqrt(5))
    w = jax.random.uniform(kw, (fan_in, fan_out), jnp.float32, -bound_w, bound_w)
    bound_b = 1.0 / math.sqrt(fan_in)
    b = jax.random.uniform(kb, (fan_out,), jnp.float32, -bound_b, bound_b)
    return w, b


def make_raw_params(key, num_features, dim, num_classes, c_depth, l_depth):
    keys = jax.random.split(key, c_depth + l_depth + 1)
    convs, in_d = [], num_features
    for i in range(c_depth):
        convs.append(_linear_init(keys[i], in_d, dim))
        in_d = dim
    lins = [_linear_init(keys[c_depth + i], dim, dim) for i in range(l_depth)]
    classifier = _linear_init(keys[-1], 2 * dim, num_classes)
    return {"convs": convs, "lins": lins, "classifier": classifier}


def _pad2(w, rows, cols):
    return jnp.zeros((rows, cols), w.dtype).at[:w.shape[0], :w.shape[1]].set(w)


def pad_params(raw, num_features, dim, num_classes):
    """Zero-pad every weight/bias to lane-dense (128-multiple) feature widths."""
    dim_pad = _round_up(dim, LANE)
    c_pad = _round_up(num_classes, LANE)
    convs = []
    for li, (w, b) in enumerate(raw["convs"]):
        rows = num_features if li == 0 else dim_pad
        convs.append((_pad2(w, rows, dim_pad), _pad2(b[None, :], 1, dim_pad)))
    lins = [(_pad2(w, dim_pad, dim_pad), _pad2(b[None, :], 1, dim_pad))
            for (w, b) in raw["lins"]]
    wc, bc = raw["classifier"]
    classifier = (_pad2(wc[:dim], dim_pad, c_pad),       # rows hit by h[src]
                  _pad2(wc[dim:], dim_pad, c_pad),       # rows hit by h[dst]
                  _pad2(bc[None, :], 1, c_pad))
    return {"convs": convs, "lins": lins, "classifier": classifier}


# ------------------------- pure-JAX reference (check) ------------------------

def simplegcn_reference(x, edge_index, raw):
    P = jax.lax.Precision.HIGHEST
    dot = lambda a, b: jnp.dot(a, b, precision=P)
    n = x.shape[0]
    adj_n = _normalized_adjacency(edge_index, n)
    h = x
    for (w, b) in raw["convs"]:
        h = jnp.maximum(dot(adj_n, dot(h, w)) + b, 0.0)
    for (w, b) in raw["lins"]:
        h = jnp.maximum(dot(h, w) + b, 0.0)
    e = jnp.concatenate([h[edge_index[0]], h[edge_index[1]]], axis=1)
    wc, bc = raw["classifier"]
    return dot(e, wc) + bc, e


# ----------------------------------- main ------------------------------------

if __name__ == "__main__":
    NUM_FEATURES = 8
    NUM_CLASSES = 3
    DIM = 32
    C_DEPTH = 2
    L_DEPTH = 2
    N_NODES = 16
    N_EDGES = 32

    root = jax.random.PRNGKey(0)
    k_x, k_e, k_p = jax.random.split(root, 3)

    x = jax.random.normal(k_x, (N_NODES, NUM_FEATURES), jnp.float32)
    edge_index = jax.random.randint(k_e, (2, N_EDGES), 0, N_NODES, jnp.int32)

    raw_params = make_raw_params(k_p, NUM_FEATURES, DIM, NUM_CLASSES, C_DEPTH, L_DEPTH)
    padded_params = pad_params(raw_params, NUM_FEATURES, DIM, NUM_CLASSES)

    out, e = simplegcn_forward(x, edge_index, padded_params,
                               dim=DIM, num_classes=NUM_CLASSES)
    jax.block_until_ready((out, e))

    assert out.shape == (N_EDGES, NUM_CLASSES)
    assert e.shape == (N_EDGES, 2 * DIM)

    out_ref, e_ref = simplegcn_reference(x, edge_index, raw_params)
    assert jnp.allclose(out, out_ref, atol=2e-3, rtol=2e-3), \
        float(jnp.abs(out - out_ref).max())
    assert jnp.allclose(e, e_ref, atol=2e-3, rtol=2e-3), \
        float(jnp.abs(e - e_ref).max())

    print("KERNEL_OK")
</pallas_src>

<mosaic_0001>
module attributes {stable_mosaic.version = 11 : i64} {
  func.func @kernel(%arg0: memref<16x16xf32, #tpu.memory_space<vmem>>, %arg1: memref<16x8xf32, #tpu.memory_space<vmem>>, %arg2: memref<32x16xf32, #tpu.memory_space<vmem>>, %arg3: memref<32x16xf32, #tpu.memory_space<vmem>>, %arg4: memref<8x128xf32, #tpu.memory_space<vmem>>, %arg5: memref<1x128xf32, #tpu.memory_space<vmem>>, %arg6: memref<128x128xf32, #tpu.memory_space<vmem>>, %arg7: memref<1x128xf32, #tpu.memory_space<vmem>>, %arg8: memref<128x128xf32, #tpu.memory_space<vmem>>, %arg9: memref<1x128xf32, #tpu.memory_space<vmem>>, %arg10: memref<128x128xf32, #tpu.memory_space<vmem>>, %arg11: memref<1x128xf32, #tpu.memory_space<vmem>>, %arg12: memref<128x128xf32, #tpu.memory_space<vmem>>, %arg13: memref<128x128xf32, #tpu.memory_space<vmem>>, %arg14: memref<1x128xf32, #tpu.memory_space<vmem>>, %arg15: memref<32x128xf32, #tpu.memory_space<vmem>>, %arg16: memref<32x256xf32, #tpu.memory_space<vmem>>) attributes {dimension_semantics = [], scalar_prefetch = 0 : i64, scratch_operands = 0 : i64, tpu.core_type = #tpu.core_type<tc>} {
    %c0 = arith.constant 0 : index
    %c0_0 = arith.constant 0 : index
    %0 = vector.load %arg0[%c0, %c0_0] : memref<16x16xf32, #tpu.memory_space<vmem>>, vector<16x16xf32>
    %c0_1 = arith.constant 0 : index
    %c0_2 = arith.constant 0 : index
    %1 = vector.load %arg1[%c0_1, %c0_2] : memref<16x8xf32, #tpu.memory_space<vmem>>, vector<16x8xf32>
    %c0_3 = arith.constant 0 : index
    %c0_4 = arith.constant 0 : index
    %2 = vector.load %arg2[%c0_3, %c0_4] : memref<32x16xf32, #tpu.memory_space<vmem>>, vector<32x16xf32>
    %c0_5 = arith.constant 0 : index
    %c0_6 = arith.constant 0 : index
    %3 = vector.load %arg3[%c0_5, %c0_6] : memref<32x16xf32, #tpu.memory_space<vmem>>, vector<32x16xf32>
    %c0_7 = arith.constant 0 : index
    %c0_8 = arith.constant 0 : index
    %4 = vector.load %arg4[%c0_7, %c0_8] : memref<8x128xf32, #tpu.memory_space<vmem>>, vector<8x128xf32>
    %c0_9 = arith.constant 0 : index
    %c0_10 = arith.constant 0 : index
    %5 = vector.load %arg5[%c0_9, %c0_10] : memref<1x128xf32, #tpu.memory_space<vmem>>, vector<1x128xf32>
    %cst = arith.constant dense<0.000000e+00> : vector<16x128xf32>
    %6 = tpu.matmul %1, %4, %cst {dimension_numbers = #tpu.dot_dimension_numbers<[1], [0], [0], [1], [0, 0, 1, 1], [], []>} : vector<16x8xf32>, vector<8x128xf32>, vector<16x128xf32> -> vector<16x128xf32>
    %cst_11 = arith.constant dense<0.000000e+00> : vector<16x128xf32>
    %7 = tpu.matmul %0, %6, %cst_11 {dimension_numbers = #tpu.dot_dimension_numbers<[1], [0], [0], [1], [0, 0, 1, 1], [], []>} : vector<16x16xf32>, vector<16x128xf32>, vector<16x128xf32> -> vector<16x128xf32>
    %8 = vector.broadcast %5 : vector<1x128xf32> to vector<16x128xf32>
    %9 = arith.addf %7, %8 : vector<16x128xf32>
    %cst_12 = arith.constant 0.000000e+00 : f32
    %10 = vector.broadcast %cst_12 : f32 to vector<16x128xf32>
    %11 = arith.maximumf %9, %10 : vector<16x128xf32>
    %c0_13 = arith.constant 0 : index
    %c0_14 = arith.constant 0 : index
    %12 = vector.load %arg6[%c0_13, %c0_14] : memref<128x128xf32, #tpu.memory_space<vmem>>, vector<128x128xf32>
    %c0_15 = arith.constant 0 : index
    %c0_16 = arith.constant 0 : index
    %13 = vector.load %arg7[%c0_15, %c0_16] : memref<1x128xf32, #tpu.memory_space<vmem>>, vector<1x128xf32>
    %cst_17 = arith.constant dense<0.000000e+00> : vector<16x128xf32>
    %14 = tpu.matmul %11, %12, %cst_17 {dimension_numbers = #tpu.dot_dimension_numbers<[1], [0], [0], [1], [0, 0, 1, 1], [], []>} : vector<16x128xf32>, vector<128x128xf32>, vector<16x128xf32> -> vector<16x128xf32>
    %cst_18 = arith.constant dense<0.000000e+00> : vector<16x128xf32>
    %15 = tpu.matmul %0, %14, %cst_18 {dimension_numbers = #tpu.dot_dimension_numbers<[1], [0], [0], [1], [0, 0, 1, 1], [], []>} : vector<16x16xf32>, vector<16x128xf32>, vector<16x128xf32> -> vector<16x128xf32>
    %16 = vector.broadcast %13 : vector<1x128xf32> to vector<16x128xf32>
    %17 = arith.addf %15, %16 : vector<16x128xf32>
    %cst_19 = arith.constant 0.000000e+00 : f32
    %18 = vector.broadcast %cst_19 : f32 to vector<16x128xf32>
    %19 = arith.maximumf %17, %18 : vector<16x128xf32>
    %c0_20 = arith.constant 0 : index
    %c0_21 = arith.constant 0 : index
    %20 = vector.load %arg8[%c0_20, %c0_21] : memref<128x128xf32, #tpu.memory_space<vmem>>, vector<128x128xf32>
    %c0_22 = arith.constant 0 : index
    %c0_23 = arith.constant 0 : index
    %21 = vector.load %arg9[%c0_22, %c0_23] : memref<1x128xf32, #tpu.memory_space<vmem>>, vector<1x128xf32>
    %cst_24 = arith.constant dense<0.000000e+00> : vector<16x128xf32>
    %22 = tpu.matmul %19, %20, %cst_24 {dimension_numbers = #tpu.dot_dimension_numbers<[1], [0], [0], [1], [0, 0, 1, 1], [], []>} : vector<16x128xf32>, vector<128x128xf32>, vector<16x128xf32> -> vector<16x128xf32>
    %23 = vector.broadcast %21 : vector<1x128xf32> to vector<16x128xf32>
    %24 = arith.addf %22, %23 : vector<16x128xf32>
    %cst_25 = arith.constant 0.000000e+00 : f32
    %25 = vector.broadcast %cst_25 : f32 to vector<16x128xf32>
    %26 = arith.maximumf %24, %25 : vector<16x128xf32>
    %c0_26 = arith.constant 0 : index
    %c0_27 = arith.constant 0 : index
    %27 = vector.load %arg10[%c0_26, %c0_27] : memref<128x128xf32, #tpu.memory_space<vmem>>, vector<128x128xf32>
    %c0_28 = arith.constant 0 : index
    %c0_29 = arith.constant 0 : index
    %28 = vector.load %arg11[%c0_28, %c0_29] : memref<1x128xf32, #tpu.memory_space<vmem>>, vector<1x128xf32>
    %cst_30 = arith.constant dense<0.000000e+00> : vector<16x128xf32>
    %29 = tpu.matmul %26, %27, %cst_30 {dimension_numbers = #tpu.dot_dimension_numbers<[1], [0], [0], [1], [0, 0, 1, 1], [], []>} : vector<16x128xf32>, vector<128x128xf32>, vector<16x128xf32> -> vector<16x128xf32>
    %30 = vector.broadcast %28 : vector<1x128xf32> to vector<16x128xf32>
    %31 = arith.addf %29, %30 : vector<16x128xf32>
    %cst_31 = arith.constant 0.000000e+00 : f32
    %32 = vector.broadcast %cst_31 : f32 to vector<16x128xf32>
    %33 = arith.maximumf %31, %32 : vector<16x128xf32>
    %c0_32 = arith.constant 0 : index
    %c0_33 = arith.constant 0 : index
    %34 = vector.load %arg12[%c0_32, %c0_33] : memref<128x128xf32, #tpu.memory_space<vmem>>, vector<128x128xf32>
    %c0_34 = arith.constant 0 : index
    %c0_35 = arith.constant 0 : index
    %35 = vector.load %arg13[%c0_34, %c0_35] : memref<128x128xf32, #tpu.memory_space<vmem>>, vector<128x128xf32>
    %c0_36 = arith.constant 0 : index
    %c0_37 = arith.constant 0 : index
    %36 = vector.load %arg14[%c0_36, %c0_37] : memref<1x128xf32, #tpu.memory_space<vmem>>, vector<1x128xf32>
    %cst_38 = arith.constant dense<0.000000e+00> : vector<32x128xf32>
    %37 = tpu.matmul %2, %33, %cst_38 {dimension_numbers = #tpu.dot_dimension_numbers<[1], [0], [0], [1], [0, 0, 1, 1], [], []>} : vector<32x16xf32>, vector<16x128xf32>, vector<32x128xf32> -> vector<32x128xf32>
    %cst_39 = arith.constant dense<0.000000e+00> : vector<32x128xf32>
    %38 = tpu.matmul %3, %33, %cst_39 {dimension_numbers = #tpu.dot_dimension_numbers<[1], [0], [0], [1], [0, 0, 1, 1], [], []>} : vector<32x16xf32>, vector<16x128xf32>, vector<32x128xf32> -> vector<32x128xf32>
    %c0_40 = arith.constant 0 : index
    %c0_41 = arith.constant 0 : index
    %39 = vector.load %arg16[%c0_40, %c0_41] : memref<32x256xf32, #tpu.memory_space<vmem>>, vector<32x128xf32>
    tpu.vector_store %arg16[%c0_40, %c0_41], %37 {strides = array<i32>} : memref<32x256xf32, #tpu.memory_space<vmem>>, vector<32x128xf32>,
    %c0_42 = arith.constant 0 : index
    %c128 = arith.constant 128 : index
    %40 = vector.load %arg16[%c0_42, %c128] : memref<32x256xf32, #tpu.memory_space<vmem>>, vector<32x128xf32>
    tpu.vector_store %arg16[%c0_42, %c128], %38 {strides = array<i32>} : memref<32x256xf32, #tpu.memory_space<vmem>>, vector<32x128xf32>,
    %cst_43 = arith.constant dense<0.000000e+00> : vector<32x128xf32>
    %41 = tpu.matmul %37, %34, %cst_43 {dimension_numbers = #tpu.dot_dimension_numbers<[1], [0], [0], [1], [0, 0, 1, 1], [], []>} : vector<32x128xf32>, vector<128x128xf32>, vector<32x128xf32> -> vector<32x128xf32>
    %cst_44 = arith.constant dense<0.000000e+00> : vector<32x128xf32>
    %42 = tpu.matmul %38, %35, %cst_44 {dimension_numbers = #tpu.dot_dimension_numbers<[1], [0], [0], [1], [0, 0, 1, 1], [], []>} : vector<32x128xf32>, vector<128x128xf32>, vector<32x128xf32> -> vector<32x128xf32>
    %43 = arith.addf %41, %42 : vector<32x128xf32>
    %44 = vector.broadcast %36 : vector<1x128xf32> to vector<32x128xf32>
    %45 = arith.addf %43, %44 : vector<32x128xf32>
    %c0_45 = arith.constant 0 : index
    %c0_46 = arith.constant 0 : index
    %46 = vector.load %arg15[%c0_45, %c0_46] : memref<32x128xf32, #tpu.memory_space<vmem>>, vector<32x128xf32>
    tpu.vector_store %arg15[%c0_45, %c0_46], %45 {strides = array<i32>} : memref<32x128xf32, #tpu.memory_space<vmem>>, vector<32x128xf32>,
    return
  }
}

</mosaic_0001>

<llo_original>
// kernel: tpu_custom_call.1
$region0: #{tpu_custom_call.1}
  #allocation0 [shape = 'u32[]', space=smem, size = 0x4, offset = 0x4, fixed_abs, tag = 'smem constant byte address 0x4 - core index']
  #allocation1 [shape = 'u32[144,128]{1,0:T(1,128)}', space=vmem, size = 0x12000, scoped, tag = 'internal scratch']
  %s0 = inlined_call_operand.hbm [shape: f32[16,16], index: 0, kind: input, shape index: {}]
  %s1 = inlined_call_operand.vmem [shape: f32[16,8], index: 1, kind: input, shape index: {}]
  %s2 = inlined_call_operand.vmem [shape: f32[32,16], index: 2, kind: input, shape index: {}]
  %s3 = inlined_call_operand.vmem [shape: f32[32,16], index: 3, kind: input, shape index: {}]
  %s4 = inlined_call_operand.hbm [shape: f32[8,128], index: 4, kind: input, shape index: {}]
  %s5 = inlined_call_operand.vmem [shape: f32[1,128], index: 5, kind: input, shape index: {}]
  %s6 = inlined_call_operand.vmem [shape: f32[128,128], index: 6, kind: input, shape index: {}]
  %s7 = inlined_call_operand.vmem [shape: f32[1,128], index: 7, kind: input, shape index: {}]
  %s8 = inlined_call_operand.hbm [shape: f32[128,128], index: 8, kind: input, shape index: {}]
  %s9 = inlined_call_operand.vmem [shape: f32[1,128], index: 9, kind: input, shape index: {}]
  %s10 = inlined_call_operand.hbm [shape: f32[128,128], index: 10, kind: input, shape index: {}]
  %s11 = inlined_call_operand.vmem [shape: f32[1,128], index: 11, kind: input, shape index: {}]
  %s12 = inlined_call_operand.hbm [shape: f32[128,128], index: 12, kind: input, shape index: {}]
  %s13 = inlined_call_operand.hbm [shape: f32[128,128], index: 13, kind: input, shape index: {}]
  %s14 = inlined_call_operand.vmem [shape: f32[1,128], index: 14, kind: input, shape index: {}]
  %s15 = inlined_call_operand.hbm [shape: f32[32,128], index: 15, kind: output, shape index: {0}]
  %s16 = inlined_call_operand.hbm [shape: f32[32,256], index: 16, kind: output, shape index: {1}]
  %17 = xla_tuple %s15, %s16
  %s18 = sld [smem:[#allocation0]]
  $region102: #{tpu_custom_call.1} parent=0
    _
  %s20 = ssub.s32 1, %s18
  %s21 = scalar_select 0, %s20, %s18
  $region1: #{tpu_custom_call.1} parent=0
    #allocation2 [shape = 'u8[8192]{0}', space=vmem, size = 0x2000, scoped, tag = 'input window, operand 0, single buffered']
    #allocation3 [shape = 's32[1]{0}', space=sflag, size = 0x4, scoped, tag = 'scoped memory for tpu_custom_call.1']
    #allocation4 [shape = 's32[1]{0}', space=sflag, size = 0x4, scoped, tag = 'scoped memory for tpu_custom_call.1']
    #allocation5 [shape = 'u8[4096]{0}', space=vmem, size = 0x1000, scoped, tag = 'input window, operand 4, single buffered']
    #allocation6 [shape = 's32[1]{0}', space=sflag, size = 0x4, scoped, tag = 'scoped memory for tpu_custom_call.1']
    #allocation7 [shape = 'u8[65536]{0}', space=vmem, size = 0x10000, scoped, tag = 'input window, operand 8, single buffered']
    #allocation8 [shape = 'u8[65536]{0}', space=vmem, size = 0x10000, scoped, tag = 'input window, operand 10, single buffered']
    #allocation9 [shape = 's32[1]{0}', space=sflag, size = 0x4, scoped, tag = 'scoped memory for tpu_custom_call.1']
    #allocation10 [shape = 'u8[65536]{0}', space=vmem, size = 0x10000, scoped, tag = 'input window, operand 12, single buffered']
    #allocation11 [shape = 'u8[65536]{0}', space=vmem, size = 0x10000, scoped, tag = 'input window, operand 13, single buffered']
    #allocation12 [shape = 's32[1]{0}', space=sflag, size = 0x4, scoped, tag = 'scoped memory for tpu_custom_call.1']
    #allocation13 [shape = 'u8[16384]{0}', space=vmem, size = 0x4000, scoped, tag = 'output window, operand 0, single buffered']
    #allocation14 [shape = 'u8[32768]{0}', space=vmem, size = 0x8000, scoped, tag = 'output window, operand 1, single buffered']
    #allocation15 [shape = 's32[1]{0}', space=sflag, size = 0x4, scoped, tag = 'scoped memory for tpu_custom_call.1']
    %22 = vsyncpa [#allocation3], 0
    %23 = vsyncpa [#allocation6], 0
    %24 = vsyncpa [#allocation9], 0
    %25 = vsyncpa [#allocation12], 0
    %26 = vsyncpa [#allocation4], 0
    %27 = vsyncpa [#allocation15], 0
    // Predicated region
    $region2: #{tpu_custom_call.1} parent=1 // pred_check
      _
    $region3: #{tpu_custom_call.1} parent=1 // pred_check_branch
      %29 = sbr.rel (0) target = $region5
    $region4: #{tpu_custom_call.1} parent=1 // pred_region
      %s31 = ssub.s32 256, 256
      %32 = vsyncadd [#allocation3], %s31
      %s33 = sshll.u32 [#allocation2], 4
      %s34 = int_to_ptr.vmem [resolvable:$true] %s33
      %39 = dma.hbm_to_vmem [thread:$0]  %s0, 256, %s34, [#allocation3], 128, 128, 8
    $region5: #{tpu_custom_call.1} parent=1 // pred_fallthru
      _
    // Predicated region
    $region6: #{tpu_custom_call.1} parent=1 // pred_check
      _
    $region7: #{tpu_custom_call.1} parent=1 // pred_check_branch
      %41 = sbr.rel (0) target = $region9
    $region8: #{tpu_custom_call.1} parent=1 // pred_region
      _
    $region9: #{tpu_custom_call.1} parent=1 // pred_fallthru
      _
    // Predicated region
    $region10: #{tpu_custom_call.1} parent=1 // pred_check
      _
    $region11: #{tpu_custom_call.1} parent=1 // pred_check_branch
      %43 = sbr.rel (0) target = $region13
    $region12: #{tpu_custom_call.1} parent=1 // pred_region
      _
    $region13: #{tpu_custom_call.1} parent=1 // pred_fallthru
      _
    // Predicated region
    $region14: #{tpu_custom_call.1} parent=1 // pred_check
      _
    $region15: #{tpu_custom_call.1} parent=1 // pred_check_branch
      %45 = sbr.rel (0) target = $region17
    $region16: #{tpu_custom_call.1} parent=1 // pred_region
      _
    $region17: #{tpu_custom_call.1} parent=1 // pred_fallthru
      _
    // Predicated region
    $region18: #{tpu_custom_call.1} parent=1 // pred_check
      _
    $region19: #{tpu_custom_call.1} parent=1 // pred_check_branch
      %47 = sbr.rel (0) target = $region21
    $region20: #{tpu_custom_call.1} parent=1 // pred_region
      %s49 = ssub.s32 128, 128
      %50 = vsyncadd [#allocation6], %s49
      %s52 = sshll.u32 [#allocation5], 4
      %s53 = int_to_ptr.vmem [resolvable:$true] %s52
      %55 = dma.hbm_to_vmem [thread:$0]  %s4, 128, %s53, [#allocation6]
    $region21: #{tpu_custom_call.1} parent=1 // pred_fallthru
      _
    // Predicated region
    $region22: #{tpu_custom_call.1} parent=1 // pred_check
      _
    $region23: #{tpu_custom_call.1} parent=1 // pred_check_branch
      %57 = sbr.rel (0) target = $region25
    $region24: #{tpu_custom_call.1} parent=1 // pred_region
      _
    $region25: #{tpu_custom_call.1} parent=1 // pred_fallthru
      _
    // Predicated region
    $region26: #{tpu_custom_call.1} parent=1 // pred_check
      _
    $region27: #{tpu_custom_call.1} parent=1 // pred_check_branch
      %59 = sbr.rel (0) target = $region29
    $region28: #{tpu_custom_call.1} parent=1 // pred_region
      _
    $region29: #{tpu_custom_call.1} parent=1 // pred_fallthru
      _
    // Predicated region
    $region30: #{tpu_custom_call.1} parent=1 // pred_check
      _
    $region31: #{tpu_custom_call.1} parent=1 // pred_check_branch
      %61 = sbr.rel (0) target = $region33
    $region32: #{tpu_custom_call.1} parent=1 // pred_region
      _
    $region33: #{tpu_custom_call.1} parent=1 // pred_fallthru
      _
    // Predicated region
    $region34: #{tpu_custom_call.1} parent=1 // pred_check
      _
    $region35: #{tpu_custom_call.1} parent=1 // pred_check_branch
      %63 = sbr.rel (0) target = $region37
    $region36: #{tpu_custom_call.1} parent=1 // pred_region
      %s65 = ssub.s32 2048, 2048
      %66 = vsyncadd [#allocation6], %s65
      %s67 = sshll.u32 [#allocation7], 4
      %s68 = int_to_ptr.vmem [resolvable:$true] %s67
      %73 = dma.hbm_to_vmem [thread:$0]  %s8, 2048, %s68, [#allocation6], 128, 128, 8
    $region37: #{tpu_custom_call.1} parent=1 // pred_fallthru
      _
    // Predicated region
    $region38: #{tpu_custom_call.1} parent=1 // pred_check
      _
    $region39: #{tpu_custom_call.1} parent=1 // pred_check_branch
      %75 = sbr.rel (0) target = $region41
    $region40: #{tpu_custom_call.1} parent=1 // pred_region
      _
    $region41: #{tpu_custom_call.1} parent=1 // pred_fallthru
      _
    // Predicated region
    $region42: #{tpu_custom_call.1} parent=1 // pred_check
      _
    $region43: #{tpu_custom_call.1} parent=1 // pred_check_branch
      %77 = sbr.rel (0) target = $region45
    $region44: #{tpu_custom_call.1} parent=1 // pred_region
      %s79 = ssub.s32 2048, 2048
      %80 = vsyncadd [#allocation9], %s79
      %s81 = sshll.u32 [#allocation8], 4
      %s82 = int_to_ptr.vmem [resolvable:$true] %s81
      %87 = dma.hbm_to_vmem [thread:$0]  %s10, 2048, %s82, [#allocation9], 128, 128, 8
    $region45: #{tpu_custom_call.1} parent=1 // pred_fallthru
      _
    // Predicated region
    $region46: #{tpu_custom_call.1} parent=1 // pred_check
      _
    $region47: #{tpu_custom_call.1} parent=1 // pred_check_branch
      %89 = sbr.rel (0) target = $region49
    $region48: #{tpu_custom_call.1} parent=1 // pred_region
      _
    $region49: #{tpu_custom_call.1} parent=1 // pred_fallthru
      _
    // Predicated region
    $region50: #{tpu_custom_call.1} parent=1 // pred_check
      _
    $region51: #{tpu_custom_call.1} parent=1 // pred_check_branch
      %91 = sbr.rel (0) target = $region53
    $region52: #{tpu_custom_call.1} parent=1 // pred_region
      %s93 = ssub.s32 2048, 2048
      %94 = vsyncadd [#allocation9], %s93
      %s95 = sshll.u32 [#allocation10], 4
      %s96 = int_to_ptr.vmem [resolvable:$true] %s95
      %101 = dma.hbm_to_vmem [thread:$0]  %s12, 2048, %s96, [#allocation9], 128, 128, 8
    $region53: #{tpu_custom_call.1} parent=1 // pred_fallthru
      _
    // Predicated region
    $region54: #{tpu_custom_call.1} parent=1 // pred_check
      _
    $region55: #{tpu_custom_call.1} parent=1 // pred_check_branch
      %103 = sbr.rel (0) target = $region57
    $region56: #{tpu_custom_call.1} parent=1 // pred_region
      %s105 = ssub.s32 2048, 2048
      %106 = vsyncadd [#allocation12], %s105
      %s107 = sshll.u32 [#allocation11], 4
      %s108 = int_to_ptr.vmem [resolvable:$true] %s107
      %113 = dma.hbm_to_vmem [thread:$0]  %s13, 2048, %s108, [#allocation12], 128, 128, 8
    $region57: #{tpu_custom_call.1} parent=1 // pred_fallthru
      _
    // Predicated region
    $region58: #{tpu_custom_call.1} parent=1 // pred_check
      _
    $region59: #{tpu_custom_call.1} parent=1 // pred_check_branch
      %115 = sbr.rel (0) target = $region61
    $region60: #{tpu_custom_call.1} parent=1 // pred_region
      _
    $region61: #{tpu_custom_call.1} parent=1 // pred_fallthru
      _
    // Predicated region
    $region62: #{tpu_custom_call.1} parent=1 // pred_check
      _
    $region63: #{tpu_custom_call.1} parent=1 // pred_check_branch
      %117 = sbr.rel (0) target = $region65
    $region64: #{tpu_custom_call.1} parent=1 // pred_region
      %118 = dma.done [#allocation3], 256
    $region65: #{tpu_custom_call.1} parent=1 // pred_fallthru
      _
    // Predicated region
    $region66: #{tpu_custom_call.1} parent=1 // pred_check
      _
    $region67: #{tpu_custom_call.1} parent=1 // pred_check_branch
      %120 = sbr.rel (0) target = $region69
    $region68: #{tpu_custom_call.1} parent=1 // pred_region
      %121 = dma.done [#allocation6], 128
    $region69: #{tpu_custom_call.1} parent=1 // pred_fallthru
      _
    // Predicated region
    $region70: #{tpu_custom_call.1} parent=1 // pred_check
      _
    $region71: #{tpu_custom_call.1} parent=1 // pred_check_branch
      %123 = sbr.rel (0) target = $region73
    $region72: #{tpu_custom_call.1} parent=1 // pred_region
      %124 = dma.done [#allocation6], 2048
    $region73: #{tpu_custom_call.1} parent=1 // pred_fallthru
      _
    // Predicated region
    $region74: #{tpu_custom_call.1} parent=1 // pred_check
      _
    $region75: #{tpu_custom_call.1} parent=1 // pred_check_branch
      %126 = sbr.rel (0) target = $region77
    $region76: #{tpu_custom_call.1} parent=1 // pred_region
      %127 = dma.done [#allocation9], 2048
    $region77: #{tpu_custom_call.1} parent=1 // pred_fallthru
      _
    // Predicated region
    $region78: #{tpu_custom_call.1} parent=1 // pred_check
      _
    $region79: #{tpu_custom_call.1} parent=1 // pred_check_branch
      %129 = sbr.rel (0) target = $region81
    $region80: #{tpu_custom_call.1} parent=1 // pred_region
      %130 = dma.done [#allocation9], 2048
    $region81: #{tpu_custom_call.1} parent=1 // pred_fallthru
      _
    // Predicated region
    $region82: #{tpu_custom_call.1} parent=1 // pred_check
      _
    $region83: #{tpu_custom_call.1} parent=1 // pred_check_branch
      %132 = sbr.rel (0) target = $region85
    $region84: #{tpu_custom_call.1} parent=1 // pred_region
      %133 = dma.done [#allocation12], 2048
    $region85: #{tpu_custom_call.1} parent=1 // pred_fallthru
      _
    %v134 = vld [vmem:[#allocation2] sm:$0xff]
    %v135 = vld [vmem:[#allocation2 + $0x8] sm:$0xff]
    %v136 = vld [vmem:[%s1] sm:$0xff]
    %v137 = vld [vmem:[%s1 + $0x8] sm:$0xff]
    %v138 = vld [vmem:[%s2] sm:$0xff]
    %v139 = vld [vmem:[%s2 + $0x8] sm:$0xff]
    %v140 = vld [vmem:[%s2 + $0x10] sm:$0xff]
    %v141 = vld [vmem:[%s2 + $0x18] sm:$0xff]
    %v142 = vld [vmem:[%s3] sm:$0xff]
    %v143 = vld [vmem:[%s3 + $0x8] sm:$0xff]
    %v144 = vld [vmem:[%s3 + $0x10] sm:$0xff]
    %v145 = vld [vmem:[%s3 + $0x18] sm:$0xff]
    %v146 = vld [vmem:[#allocation5] sm:$0xff]
    %v147 = vld [vmem:[%s5] sm:$0x1]
    %vm148 = vcmask 64512
    %v150 = vsel %vm148, %v136, 0
    %v153 = vsel %vm148, %v137, 0
    %155 = vmatprep.subr.mxu0 0.0
    %156 = vmatpush1.msra.mxu0 0.0
    %157 = vmatprep.subr.mxu0 0.0
    %158 = vmatpush1.msra.mxu0 0.0
    %159 = vmatprep.subr.mxu0 0.0
    %160 = vmatpush1.msra.mxu0 0.0
    %161 = vmatprep.subr.mxu0 0.0
    %162 = vmatpush1.msra.mxu0 0.0
    %163 = vmatprep.subr.mxu0 0.0
    %164 = vmatpush1.msra.mxu0 0.0
    %165 = vmatprep.subr.mxu0 0.0
    %166 = vmatpush1.msra.mxu0 0.0
    %167 = vmatprep.subr.mxu0 0.0
    %168 = vmatpush1.msra.mxu0 0.0
    %169 = vmatprep.subr.mxu0 0.0
    %170 = vmatpush1.msra.mxu0 0.0
    %171 = vmatprep.subr.mxu0 0.0
    %172 = vmatpush1.msra.mxu0 0.0
    %173 = vmatprep.subr.mxu0 0.0
    %174 = vmatpush1.msra.mxu0 0.0
    %175 = vmatprep.subr.mxu0 0.0
    %176 = vmatpush1.msra.mxu0 0.0
    %177 = vmatprep.subr.mxu0 0.0
    %178 = vmatpush1.msra.mxu0 0.0
    %179 = vmatprep.subr.mxu0 0.0
    %180 = vmatpush1.msra.mxu0 0.0
    %181 = vmatprep.subr.mxu0 0.0
    %182 = vmatpush1.msra.mxu0 0.0
    %183 = vmatprep.subr.mxu0 0.0
    %184 = vmatpush1.msra.mxu0 0.0
    %185 = vmatprep.subr.mxu0 0.0
    %186 = vmatpush1.msra.mxu0 %v146
    %187 = vmatprep.subr.mxu0 0.0
    %188 = vmatpush2.msra.mxu0 0.0
    %189 = vmatprep.subr.mxu0 0.0
    %190 = vmatpush2.msra.mxu0 0.0
    %191 = vmatprep.subr.mxu0 0.0
    %192 = vmatpush2.msra.mxu0 0.0
    %193 = vmatprep.subr.mxu0 0.0
    %194 = vmatpush2.msra.mxu0 0.0
    %195 = vmatprep.subr.mxu0 0.0
    %196 = vmatpush2.msra.mxu0 0.0
    %197 = vmatprep.subr.mxu0 0.0
    %198 = vmatpush2.msra.mxu0 0.0
    %199 = vmatprep.subr.mxu0 0.0
    %200 = vmatpush2.msra.mxu0 0.0
    %201 = vmatprep.subr.mxu0 0.0
    %202 = vmatpush2.msra.mxu0 0.0
    %203 = vmatprep.subr.mxu0 0.0
    %204 = vmatpush2.msra.mxu0 0.0
    %205 = vmatprep.subr.mxu0 0.0
    %206 = vmatpush2.msra.mxu0 0.0
    %207 = vmatprep.subr.mxu0 0.0
    %208 = vmatpush2.msra.mxu0 0.0
    %209 = vmatprep.subr.mxu0 0.0
    %210 = vmatpush2.msra.mxu0 0.0
    %211 = vmatprep.subr.mxu0 0.0
    %212 = vmatpush2.msra.mxu0 0.0
    %213 = vmatprep.subr.mxu0 0.0
    %214 = vmatpush2.msra.mxu0 0.0
    %215 = vmatprep.subr.mxu0 0.0
    %216 = vmatpush2.msra.mxu0 0.0
    %217 = vmatprep.subr.mxu0 0.0
    %218 = vmatpush2.msra.mxu0 0.0
    %219 = vmatprep.mubr.f32.mxu0 0.0
    %220 = vmatmul.mubr.f32.gmra.mxu0 %v150
    %v221 = vpop.f32.mrf.mxu0
    %v222 = vadd.f32 0.0, %v221
    %v223 = vpop.f32.mrf.mxu0
    %224 = vmatprep.mubr.f32.mxu0 0.0
    %225 = vmatmul.mubr.f32.gmra.mxu0 %v153
    %v226 = vpop.f32.mrf.mxu0
    %v227 = vadd.f32 0.0, %v226
    %v228 = vpop.f32.mrf.mxu0
    %229 = vdwg.mxu0
    %v231 = vlaneseq
    %v232 = vshrl.u32 %v231, 7
    %v233 = vsub.s32 0, %v232
    %v234 = vrot.slane %v147, %v233
    %vm236 = vcmask 130048
    %v238 = vsel %vm236, %v134, 0
    %v241 = vsel %vm236, %v135, 0
    %243 = vmatprep.subr.mxu0 0.0
    %244 = vmatpush1.msra.mxu0 0.0
    %245 = vmatprep.subr.mxu0 0.0
    %246 = vmatpush1.msra.mxu0 0.0
    %247 = vmatprep.subr.mxu0 0.0
    %248 = vmatpush1.msra.mxu0 0.0
    %249 = vmatprep.subr.mxu0 0.0
    %250 = vmatpush1.msra.mxu0 0.0
    %251 = vmatprep.subr.mxu0 0.0
    %252 = vmatpush1.msra.mxu0 0.0
    %253 = vmatprep.subr.mxu0 0.0
    %254 = vmatpush1.msra.mxu0 0.0
    %255 = vmatprep.subr.mxu0 0.0
    %256 = vmatpush1.msra.mxu0 0.0
    %257 = vmatprep.subr.mxu0 0.0
    %258 = vmatpush1.msra.mxu0 0.0
    %259 = vmatprep.subr.mxu0 0.0
    %260 = vmatpush1.msra.mxu0 0.0
    %261 = vmatprep.subr.mxu0 0.0
    %262 = vmatpush1.msra.mxu0 0.0
    %263 = vmatprep.subr.mxu0 0.0
    %264 = vmatpush1.msra.mxu0 0.0
    %265 = vmatprep.subr.mxu0 0.0
    %266 = vmatpush1.msra.mxu0 0.0
    %267 = vmatprep.subr.mxu0 0.0
    %268 = vmatpush1.msra.mxu0 0.0
    %269 = vmatprep.subr.mxu0 0.0
    %270 = vmatpush1.msra.mxu0 0.0
    %271 = vmatprep.subr.mxu0 0.0
    %272 = vmatpush1.msra.mxu0 %v227
    %273 = vmatprep.subr.mxu0 0.0
    %274 = vmatpush1.msra.mxu0 %v222
    %275 = vmatprep.subr.mxu0 0.0
    %276 = vmatpush2.msra.mxu0 0.0
    %277 = vmatprep.subr.mxu0 0.0
    %278 = vmatpush2.msra.mxu0 0.0
    %279 = vmatprep.subr.mxu0 0.0
    %280 = vmatpush2.msra.mxu0 0.0
    %281 = vmatprep.subr.mxu0 0.0
    %282 = vmatpush2.msra.mxu0 0.0
    %283 = vmatprep.subr.mxu0 0.0
    %284 = vmatpush2.msra.mxu0 0.0
    %285 = vmatprep.subr.mxu0 0.0
    %286 = vmatpush2.msra.mxu0 0.0
    %287 = vmatprep.subr.mxu0 0.0
    %288 = vmatpush2.msra.mxu0 0.0
    %289 = vmatprep.subr.mxu0 0.0
    %290 = vmatpush2.msra.mxu0 0.0
    %291 = vmatprep.subr.mxu0 0.0
    %292 = vmatpush2.msra.mxu0 0.0
    %293 = vmatprep.subr.mxu0 0.0
    %294 = vmatpush2.msra.mxu0 0.0
    %295 = vmatprep.subr.mxu0 0.0
    %296 = vmatpush2.msra.mxu0 0.0
    %297 = vmatprep.subr.mxu0 0.0
    %298 = vmatpush2.msra.mxu0 0.0
    %299 = vmatprep.subr.mxu0 0.0
    %300 = vmatpush2.msra.mxu0 0.0
    %301 = vmatprep.subr.mxu0 0.0
    %302 = vmatpush2.msra.mxu0 0.0
    %303 = vmatprep.subr.mxu0 0.0
    %304 = vmatpush2.msra.mxu0 0.0
    %305 = vmatprep.subr.mxu0 0.0
    %306 = vmatpush2.msra.mxu0 0.0
    %307 = vmatprep.mubr.f32.mxu0 0.0
    %308 = vmatmul.mubr.f32.gmra.mxu0 %v238
    %v309 = vpop.f32.mrf.mxu0
    %v310 = vadd.f32 %v234, %v309
    %v311 = vpop.f32.mrf.mxu0
    %312 = vmatprep.mubr.f32.mxu0 0.0
    %313 = vmatmul.mubr.f32.gmra.mxu0 %v241
    %v314 = vpop.f32.mrf.mxu0
    %v315 = vadd.f32 %v234, %v314
    %v316 = vpop.f32.mrf.mxu0
    %317 = vdwg.mxu0
    %v318 = vmax.f32 %v310, 0.0
    %v319 = vmax.f32 %v315, 0.0
    %v320 = vld [vmem:[%s6] sm:$0xff]
    %v321 = vld [vmem:[%s6 + $0x8] sm:$0xff]
    %v322 = vld [vmem:[%s6 + $0x10] sm:$0xff]
    %v323 = vld [vmem:[%s6 + $0x18] sm:$0xff]
    %v324 = vld [vmem:[%s6 + $0x20] sm:$0xff]
    %v325 = vld [vmem:[%s6 + $0x28] sm:$0xff]
    %v326 = vld [vmem:[%s6 + $0x30] sm:$0xff]
    %v327 = vld [vmem:[%s6 + $0x38] sm:$0xff]
    %v328 = vld [vmem:[%s6 + $0x40] sm:$0xff]
    %v329 = vld [vmem:[%s6 + $0x48] sm:$0xff]
    %v330 = vld [vmem:[%s6 + $0x50] sm:$0xff]
    %v331 = vld [vmem:[%s6 + $0x58] sm:$0xff]
    %v332 = vld [vmem:[%s6 + $0x60] sm:$0xff]
    %v333 = vld [vmem:[%s6 + $0x68] sm:$0xff]
    %v334 = vld [vmem:[%s6 + $0x70] sm:$0xff]
    %v335 = vld [vmem:[%s6 + $0x78] sm:$0xff]
    %v336 = vld [vmem:[%s7] sm:$0x1]
    %337 = vmatprep.subr.mxu0 0.0
    %338 = vmatpush1.msra.mxu0 %v335
    %339 = vmatprep.subr.mxu0 0.0
    %340 = vmatpush1.msra.mxu0 %v334
    %341 = vmatprep.subr.mxu0 0.0
    %342 = vmatpush1.msra.mxu0 %v333
    %343 = vmatprep.subr.mxu0 0.0
    %344 = vmatpush1.msra.mxu0 %v332
    %345 = vmatprep.subr.mxu0 0.0
    %346 = vmatpush1.msra.mxu0 %v331
    %347 = vmatprep.subr.mxu0 0.0
    %348 = vmatpush1.msra.mxu0 %v330
    %349 = vmatprep.subr.mxu0 0.0
    %350 = vmatpush1.msra.mxu0 %v329
    %351 = vmatprep.subr.mxu0 0.0
    %352 = vmatpush1.msra.mxu0 %v328
    %353 = vmatprep.subr.mxu0 0.0
    %354 = vmatpush1.msra.mxu0 %v327
    %355 = vmatprep.subr.mxu0 0.0
    %356 = vmatpush1.msra.mxu0 %v326
    %357 = vmatprep.subr.mxu0 0.0
    %358 = vmatpush1.msra.mxu0 %v325
    %359 = vmatprep.subr.mxu0 0.0
    %360 = vmatpush1.msra.mxu0 %v324
    %361 = vmatprep.subr.mxu0 0.0
    %362 = vmatpush1.msra.mxu0 %v323
    %363 = vmatprep.subr.mxu0 0.0
    %364 = vmatpush1.msra.mxu0 %v322
    %365 = vmatprep.subr.mxu0 0.0
    %366 = vmatpush1.msra.mxu0 %v321
    %367 = vmatprep.subr.mxu0 0.0
    %368 = vmatpush1.msra.mxu0 %v320
    %369 = vmatprep.subr.mxu0 0.0
    %370 = vmatpush2.msra.mxu0 0.0
    %371 = vmatprep.subr.mxu0 0.0
    %372 = vmatpush2.msra.mxu0 0.0
    %373 = vmatprep.subr.mxu0 0.0
    %374 = vmatpush2.msra.mxu0 0.0
    %375 = vmatprep.subr.mxu0 0.0
    %376 = vmatpush2.msra.mxu0 0.0
    %377 = vmatprep.subr.mxu0 0.0
    %378 = vmatpush2.msra.mxu0 0.0
    %379 = vmatprep.subr.mxu0 0.0
    %380 = vmatpush2.msra.mxu0 0.0
    %381 = vmatprep.subr.mxu0 0.0
    %382 = vmatpush2.msra.mxu0 0.0
    %383 = vmatprep.subr.mxu0 0.0
    %384 = vmatpush2.msra.mxu0 0.0
    %385 = vmatprep.subr.mxu0 0.0
    %386 = vmatpush2.msra.mxu0 0.0
    %387 = vmatprep.subr.mxu0 0.0
    %388 = vmatpush2.msra.mxu0 0.0
    %389 = vmatprep.subr.mxu0 0.0
    %390 = vmatpush2.msra.mxu0 0.0
    %391 = vmatprep.subr.mxu0 0.0
    %392 = vmatpush2.msra.mxu0 0.0
    %393 = vmatprep.subr.mxu0 0.0
    %394 = vmatpush2.msra.mxu0 0.0
    %395 = vmatprep.subr.mxu0 0.0
    %396 = vmatpush2.msra.mxu0 0.0
    %397 = vmatprep.subr.mxu0 0.0
    %398 = vmatpush2.msra.mxu0 0.0
    %399 = vmatprep.subr.mxu0 0.0
    %400 = vmatpush2.msra.mxu0 0.0
    %401 = vmatprep.mubr.f32.mxu0 0.0
    %402 = vmatmul.mubr.f32.gmra.mxu0 %v318
    %v403 = vpop.f32.mrf.mxu0
    %v404 = vadd.f32 0.0, %v403
    %v405 = vpop.f32.mrf.mxu0
    %406 = vmatprep.mubr.f32.mxu0 0.0
    %407 = vmatmul.mubr.f32.gmra.mxu0 %v319
    %v408 = vpop.f32.mrf.mxu0
    %v409 = vadd.f32 0.0, %v408
    %v410 = vpop.f32.mrf.mxu0
    %411 = vdwg.mxu0
    %v413 = vlaneseq
    %v414 = vshrl.u32 %v413, 7
    %v415 = vsub.s32 0, %v414
    %v416 = vrot.slane %v336, %v415
    %418 = vmatprep.subr.mxu0 0.0
    %419 = vmatpush1.msra.mxu0 0.0
    %420 = vmatprep.subr.mxu0 0.0
    %421 = vmatpush1.msra.mxu0 0.0
    %422 = vmatprep.subr.mxu0 0.0
    %423 = vmatpush1.msra.mxu0 0.0
    %424 = vmatprep.subr.mxu0 0.0
    %425 = vmatpush1.msra.mxu0 0.0
    %426 = vmatprep.subr.mxu0 0.0
    %427 = vmatpush1.msra.mxu0 0.0
    %428 = vmatprep.subr.mxu0 0.0
    %429 = vmatpush1.msra.mxu0 0.0
    %430 = vmatprep.subr.mxu0 0.0
    %431 = vmatpush1.msra.mxu0 0.0
    %432 = vmatprep.subr.mxu0 0.0
    %433 = vmatpush1.msra.mxu0 0.0
    %434 = vmatprep.subr.mxu0 0.0
    %435 = vmatpush1.msra.mxu0 0.0
    %436 = vmatprep.subr.mxu0 0.0
    %437 = vmatpush1.msra.mxu0 0.0
    %438 = vmatprep.subr.mxu0 0.0
    %439 = vmatpush1.msra.mxu0 0.0
    %440 = vmatprep.subr.mxu0 0.0
    %441 = vmatpush1.msra.mxu0 0.0
    %442 = vmatprep.subr.mxu0 0.0
    %443 = vmatpush1.msra.mxu0 0.0
    %444 = vmatprep.subr.mxu0 0.0
    %445 = vmatpush1.msra.mxu0 0.0
    %446 = vmatprep.subr.mxu0 0.0
    %447 = vmatpush1.msra.mxu0 %v409
    %448 = vmatprep.subr.mxu0 0.0
    %449 = vmatpush1.msra.mxu0 %v404
    %450 = vmatprep.subr.mxu0 0.0
    %451 = vmatpush2.msra.mxu0 0.0
    %452 = vmatprep.subr.mxu0 0.0
    %453 = vmatpush2.msra.mxu0 0.0
    %454 = vmatprep.subr.mxu0 0.0
    %455 = vmatpush2.msra.mxu0 0.0
    %456 = vmatprep.subr.mxu0 0.0
    %457 = vmatpush2.msra.mxu0 0.0
    %458 = vmatprep.subr.mxu0 0.0
    %459 = vmatpush2.msra.mxu0 0.0
    %460 = vmatprep.subr.mxu0 0.0
    %461 = vmatpush2.msra.mxu0 0.0
    %462 = vmatprep.subr.mxu0 0.0
    %463 = vmatpush2.msra.mxu0 0.0
    %464 = vmatprep.subr.mxu0 0.0
    %465 = vmatpush2.msra.mxu0 0.0
    %466 = vmatprep.subr.mxu0 0.0
    %467 = vmatpush2.msra.mxu0 0.0
    %468 = vmatprep.subr.mxu0 0.0
    %469 = vmatpush2.msra.mxu0 0.0
    %470 = vmatprep.subr.mxu0 0.0
    %471 = vmatpush2.msra.mxu0 0.0
    %472 = vmatprep.subr.mxu0 0.0
    %473 = vmatpush2.msra.mxu0 0.0
    %474 = vmatprep.subr.mxu0 0.0
    %475 = vmatpush2.msra.mxu0 0.0
    %476 = vmatprep.subr.mxu0 0.0
    %477 = vmatpush2.msra.mxu0 0.0
    %478 = vmatprep.subr.mxu0 0.0
    %479 = vmatpush2.msra.mxu0 0.0
    %480 = vmatprep.subr.mxu0 0.0
    %481 = vmatpush2.msra.mxu0 0.0
    %482 = vmatprep.mubr.f32.mxu0 0.0
    %483 = vmatmul.mubr.f32.gmra.mxu0 %v238
    %v484 = vpop.f32.mrf.mxu0
    %v485 = vadd.f32 %v416, %v484
    %v486 = vpop.f32.mrf.mxu0
    %487 = vmatprep.mubr.f32.mxu0 0.0
    %488 = vmatmul.mubr.f32.gmra.mxu0 %v241
    %v489 = vpop.f32.mrf.mxu0
    %v490 = vadd.f32 %v416, %v489
    %v491 = vpop.f32.mrf.mxu0
    %492 = vdwg.mxu0
    %v493 = vmax.f32 %v485, 0.0
    %v494 = vmax.f32 %v490, 0.0
    %v495 = vld [vmem:[#allocation7] sm:$0xff]
    %v496 = vld [vmem:[#allocation7 + $0x8] sm:$0xff]
    %v497 = vld [vmem:[#allocation7 + $0x10] sm:$0xff]
    %v498 = vld [vmem:[#allocation7 + $0x18] sm:$0xff]
    %v499 = vld [vmem:[#allocation7 + $0x20] sm:$0xff]
    %v500 = vld [vmem:[#allocation7 + $0x28] sm:$0xff]
    %v501 = vld [vmem:[#allocation7 + $0x30] sm:$0xff]
    %v502 = vld [vmem:[#allocation7 + $0x38] sm:$0xff]
    %v503 = vld [vmem:[#allocation7 + $0x40] sm:$0xff]
    %v504 = vld [vmem:[#allocation7 + $0x48] sm:$0xff]
    %v505 = vld [vmem:[#allocation7 + $0x50] sm:$0xff]
    %v506 = vld [vmem:[#allocation7 + $0x58] sm:$0xff]
    %v507 = vld [vmem:[#allocation7 + $0x60] sm:$0xff]
    %v508 = vld [vmem:[#allocation7 + $0x68] sm:$0xff]
    %v509 = vld [vmem:[#allocation7 + $0x70] sm:$0xff]
    %v510 = vld [vmem:[#allocation7 + $0x78] sm:$0xff]
    %v511 = vld [vmem:[%s9] sm:$0x1]
    %v513 = vlaneseq
    %v514 = vshrl.u32 %v513, 7
    %v515 = vsub.s32 0, %v514
    %v516 = vrot.slane %v511, %v515
    %518 = vmatprep.subr.mxu0 0.0
    %519 = vmatpush1.msra.mxu0 %v510
    %520 = vmatprep.subr.mxu0 0.0
    %521 = vmatpush1.msra.mxu0 %v509
    %522 = vmatprep.subr.mxu0 0.0
    %523 = vmatpush1.msra.mxu0 %v508
    %524 = vmatprep.subr.mxu0 0.0
    %525 = vmatpush1.msra.mxu0 %v507
    %526 = vmatprep.subr.mxu0 0.0
    %527 = vmatpush1.msra.mxu0 %v506
    %528 = vmatprep.subr.mxu0 0.0
    %529 = vmatpush1.msra.mxu0 %v505
    %530 = vmatprep.subr.mxu0 0.0
    %531 = vmatpush1.msra.mxu0 %v504
    %532 = vmatprep.subr.mxu0 0.0
    %533 = vmatpush1.msra.mxu0 %v503
    %534 = vmatprep.subr.mxu0 0.0
    %535 = vmatpush1.msra.mxu0 %v502
    %536 = vmatprep.subr.mxu0 0.0
    %537 = vmatpush1.msra.mxu0 %v501
    %538 = vmatprep.subr.mxu0 0.0
    %539 = vmatpush1.msra.mxu0 %v500
    %540 = vmatprep.subr.mxu0 0.0
    %541 = vmatpush1.msra.mxu0 %v499
    %542 = vmatprep.subr.mxu0 0.0
    %543 = vmatpush1.msra.mxu0 %v498
    %544 = vmatprep.subr.mxu0 0.0
    %545 = vmatpush1.msra.mxu0 %v497
    %546 = vmatprep.subr.mxu0 0.0
    %547 = vmatpush1.msra.mxu0 %v496
    %548 = vmatprep.subr.mxu0 0.0
    %549 = vmatpush1.msra.mxu0 %v495
    %550 = vmatprep.subr.mxu0 0.0
    %551 = vmatpush2.msra.mxu0 0.0
    %552 = vmatprep.subr.mxu0 0.0
    %553 = vmatpush2.msra.mxu0 0.0
    %554 = vmatprep.subr.mxu0 0.0
    %555 = vmatpush2.msra.mxu0 0.0
    %556 = vmatprep.subr.mxu0 0.0
    %557 = vmatpush2.msra.mxu0 0.0
    %558 = vmatprep.subr.mxu0 0.0
    %559 = vmatpush2.msra.mxu0 0.0
    %560 = vmatprep.subr.mxu0 0.0
    %561 = vmatpush2.msra.mxu0 0.0
    %562 = vmatprep.subr.mxu0 0.0
    %563 = vmatpush2.msra.mxu0 0.0
    %564 = vmatprep.subr.mxu0 0.0
    %565 = vmatpush2.msra.mxu0 0.0
    %566 = vmatprep.subr.mxu0 0.0
    %567 = vmatpush2.msra.mxu0 0.0
    %568 = vmatprep.subr.mxu0 0.0
    %569 = vmatpush2.msra.mxu0 0.0
    %570 = vmatprep.subr.mxu0 0.0
    %571 = vmatpush2.msra.mxu0 0.0
    %572 = vmatprep.subr.mxu0 0.0
    %573 = vmatpush2.msra.mxu0 0.0
    %574 = vmatprep.subr.mxu0 0.0
    %575 = vmatpush2.msra.mxu0 0.0
    %576 = vmatprep.subr.mxu0 0.0
    %577 = vmatpush2.msra.mxu0 0.0
    %578 = vmatprep.subr.mxu0 0.0
    %579 = vmatpush2.msra.mxu0 0.0
    %580 = vmatprep.subr.mxu0 0.0
    %581 = vmatpush2.msra.mxu0 0.0
    %582 = vmatprep.mubr.f32.mxu0 0.0
    %583 = vmatmul.mubr.f32.gmra.mxu0 %v493
    %v584 = vpop.f32.mrf.mxu0
    %v585 = vadd.f32 %v516, %v584
    %v586 = vpop.f32.mrf.mxu0
    %587 = vmatprep.mubr.f32.mxu0 0.0
    %588 = vmatmul.mubr.f32.gmra.mxu0 %v494
    %v589 = vpop.f32.mrf.mxu0
    %v590 = vadd.f32 %v516, %v589
    %v591 = vpop.f32.mrf.mxu0
    %592 = vdwg.mxu0
    %v593 = vmax.f32 %v585, 0.0
    %v594 = vmax.f32 %v590, 0.0
    %v595 = vld [vmem:[#allocation8] sm:$0xff]
    %v596 = vld [vmem:[#allocation8 + $0x8] sm:$0xff]
    %v597 = vld [vmem:[#allocation8 + $0x10] sm:$0xff]
    %v598 = vld [vmem:[#allocation8 + $0x18] sm:$0xff]
    %v599 = vld [vmem:[#allocation8 + $0x20] sm:$0xff]
    %v600 = vld [vmem:[#allocation8 + $0x28] sm:$0xff]
    %v601 = vld [vmem:[#allocation8 + $0x30] sm:$0xff]
    %v602 = vld [vmem:[#allocation8 + $0x38] sm:$0xff]
    %v603 = vld [vmem:[#allocation8 + $0x40] sm:$0xff]
    %v604 = vld [vmem:[#allocation8 + $0x48] sm:$0xff]
    %v605 = vld [vmem:[#allocation8 + $0x50] sm:$0xff]
    %v606 = vld [vmem:[#allocation8 + $0x58] sm:$0xff]
    %v607 = vld [vmem:[#allocation8 + $0x60] sm:$0xff]
    %v608 = vld [vmem:[#allocation8 + $0x68] sm:$0xff]
    %v609 = vld [vmem:[#allocation8 + $0x70] sm:$0xff]
    %v610 = vld [vmem:[#allocation8 + $0x78] sm:$0xff]
    %v611 = vld [vmem:[%s11] sm:$0x1]
    %v613 = vlaneseq
    %v614 = vshrl.u32 %v613, 7
    %v615 = vsub.s32 0, %v614
    %v616 = vrot.slane %v611, %v615
    %618 = vmatprep.subr.mxu0 0.0
    %619 = vmatpush1.msra.mxu0 %v610
    %620 = vmatprep.subr.mxu0 0.0
    %621 = vmatpush1.msra.mxu0 %v609
    %622 = vmatprep.subr.mxu0 0.0
    %623 = vmatpush1.msra.mxu0 %v608
    %624 = vmatprep.subr.mxu0 0.0
    %625 = vmatpush1.msra.mxu0 %v607
    %626 = vmatprep.subr.mxu0 0.0
    %627 = vmatpush1.msra.mxu0 %v606
    %628 = vmatprep.subr.mxu0 0.0
    %629 = vmatpush1.msra.mxu0 %v605
    %630 = vmatprep.subr.mxu0 0.0
    %631 = vmatpush1.msra.mxu0 %v604
    %632 = vmatprep.subr.mxu0 0.0
    %633 = vmatpush1.msra.mxu0 %v603
    %634 = vmatprep.subr.mxu0 0.0
    %635 = vmatpush1.msra.mxu0 %v602
    %636 = vmatprep.subr.mxu0 0.0
    %637 = vmatpush1.msra.mxu0 %v601
    %638 = vmatprep.subr.mxu0 0.0
    %639 = vmatpush1.msra.mxu0 %v600
    %640 = vmatprep.subr.mxu0 0.0
    %641 = vmatpush1.msra.mxu0 %v599
    %642 = vmatprep.subr.mxu0 0.0
    %643 = vmatpush1.msra.mxu0 %v598
    %644 = vmatprep.subr.mxu0 0.0
    %645 = vmatpush1.msra.mxu0 %v597
    %646 = vmatprep.subr.mxu0 0.0
    %647 = vmatpush1.msra.mxu0 %v596
    %648 = vmatprep.subr.mxu0 0.0
    %649 = vmatpush1.msra.mxu0 %v595
    %650 = vmatprep.subr.mxu0 0.0
    %651 = vmatpush2.msra.mxu0 0.0
    %652 = vmatprep.subr.mxu0 0.0
    %653 = vmatpush2.msra.mxu0 0.0
    %654 = vmatprep.subr.mxu0 0.0
    %655 = vmatpush2.msra.mxu0 0.0
    %656 = vmatprep.subr.mxu0 0.0
    %657 = vmatpush2.msra.mxu0 0.0
    %658 = vmatprep.subr.mxu0 0.0
    %659 = vmatpush2.msra.mxu0 0.0
    %660 = vmatprep.subr.mxu0 0.0
    %661 = vmatpush2.msra.mxu0 0.0
    %662 = vmatprep.subr.mxu0 0.0
    %663 = vmatpush2.msra.mxu0 0.0
    %664 = vmatprep.subr.mxu0 0.0
    %665 = vmatpush2.msra.mxu0 0.0
    %666 = vmatprep.subr.mxu0 0.0
    %667 = vmatpush2.msra.mxu0 0.0
    %668 = vmatprep.subr.mxu0 0.0
    %669 = vmatpush2.msra.mxu0 0.0
    %670 = vmatprep.subr.mxu0 0.0
    %671 = vmatpush2.msra.mxu0 0.0
    %672 = vmatprep.subr.mxu0 0.0
    %673 = vmatpush2.msra.mxu0 0.0
    %674 = vmatprep.subr.mxu0 0.0
    %675 = vmatpush2.msra.mxu0 0.0
    %676 = vmatprep.subr.mxu0 0.0
    %677 = vmatpush2.msra.mxu0 0.0
    %678 = vmatprep.subr.mxu0 0.0
    %679 = vmatpush2.msra.mxu0 0.0
    %680 = vmatprep.subr.mxu0 0.0
    %681 = vmatpush2.msra.mxu0 0.0
    %682 = vmatprep.mubr.f32.mxu0 0.0
    %683 = vmatmul.mubr.f32.gmra.mxu0 %v593
    %v684 = vpop.f32.mrf.mxu0
    %v685 = vadd.f32 %v616, %v684
    %v686 = vpop.f32.mrf.mxu0
    %687 = vmatprep.mubr.f32.mxu0 0.0
    %688 = vmatmul.mubr.f32.gmra.mxu0 %v594
    %v689 = vpop.f32.mrf.mxu0
    %v690 = vadd.f32 %v616, %v689
    %v691 = vpop.f32.mrf.mxu0
    %692 = vdwg.mxu0
    %v693 = vmax.f32 %v685, 0.0
    %v694 = vmax.f32 %v690, 0.0
    %v695 = vld [vmem:[#allocation10] sm:$0xff]
    %v696 = vld [vmem:[#allocation10 + $0x8] sm:$0xff]
    %v697 = vld [vmem:[#allocation10 + $0x10] sm:$0xff]
    %v698 = vld [vmem:[#allocation10 + $0x18] sm:$0xff]
    %v699 = vld [vmem:[#allocation10 + $0x20] sm:$0xff]
    %v700 = vld [vmem:[#allocation10 + $0x28] sm:$0xff]
    %v701 = vld [vmem:[#allocation10 + $0x30] sm:$0xff]
    %v702 = vld [vmem:[#allocation10 + $0x38] sm:$0xff]
    %v703 = vld [vmem:[#allocation10 + $0x40] sm:$0xff]
    %v704 = vld [vmem:[#allocation10 + $0x48] sm:$0xff]
    %v705 = vld [vmem:[#allocation10 + $0x50] sm:$0xff]
    %v706 = vld [vmem:[#allocation10 + $0x58] sm:$0xff]
    %v707 = vld [vmem:[#allocation10 + $0x60] sm:$0xff]
    %v708 = vld [vmem:[#allocation10 + $0x68] sm:$0xff]
    %v709 = vld [vmem:[#allocation10 + $0x70] sm:$0xff]
    %v710 = vld [vmem:[#allocation10 + $0x78] sm:$0xff]
    %v711 = vld [vmem:[#allocation11] sm:$0xff]
    %v712 = vld [vmem:[#allocation11 + $0x8] sm:$0xff]
    %v713 = vld [vmem:[#allocation11 + $0x10] sm:$0xff]
    %v714 = vld [vmem:[#allocation11 + $0x18] sm:$0xff]
    %v715 = vld [vmem:[#allocation11 + $0x20] sm:$0xff]
    %v716 = vld [vmem:[#allocation11 + $0x28] sm:$0xff]
    %v717 = vld [vmem:[#allocation11 + $0x30] sm:$0xff]
    %v718 = vld [vmem:[#allocation11 + $0x38] sm:$0xff]
    %v719 = vld [vmem:[#allocation11 + $0x40] sm:$0xff]
    %v720 = vld [vmem:[#allocation11 + $0x48] sm:$0xff]
    %v721 = vld [vmem:[#allocation11 + $0x50] sm:$0xff]
    %v722 = vld [vmem:[#allocation11 + $0x58] sm:$0xff]
    %v723 = vld [vmem:[#allocation11 + $0x60] sm:$0xff]
    %v724 = vld [vmem:[#allocation11 + $0x68] sm:$0xff]
    %v725 = vld [vmem:[#allocation11 + $0x70] sm:$0xff]
    %v726 = vld [vmem:[#allocation11 + $0x78] sm:$0xff]
    %v727 = vld [vmem:[%s14] sm:$0x1]
    %v729 = vsel %vm236, %v138, 0
    %v732 = vsel %vm236, %v139, 0
    %v735 = vsel %vm236, %v140, 0
    %v738 = vsel %vm236, %v141, 0
    %740 = vmatprep.subr.mxu0 0.0
    %741 = vmatpush1.msra.mxu0 0.0
    %742 = vmatprep.subr.mxu0 0.0
    %743 = vmatpush1.msra.mxu0 0.0
    %744 = vmatprep.subr.mxu0 0.0
    %745 = vmatpush1.msra.mxu0 0.0
    %746 = vmatprep.subr.mxu0 0.0
    %747 = vmatpush1.msra.mxu0 0.0
    %748 = vmatprep.subr.mxu0 0.0
    %749 = vmatpush1.msra.mxu0 0.0
    %750 = vmatprep.subr.mxu0 0.0
    %751 = vmatpush1.msra.mxu0 0.0
    %752 = vmatprep.subr.mxu0 0.0
    %753 = vmatpush1.msra.mxu0 0.0
    %754 = vmatprep.subr.mxu0 0.0
    %755 = vmatpush1.msra.mxu0 0.0
    %756 = vmatprep.subr.mxu0 0.0
    %757 = vmatpush1.msra.mxu0 0.0
    %758 = vmatprep.subr.mxu0 0.0
    %759 = vmatpush1.msra.mxu0 0.0
    %760 = vmatprep.subr.mxu0 0.0
    %761 = vmatpush1.msra.mxu0 0.0
    %762 = vmatprep.subr.mxu0 0.0
    %763 = vmatpush1.msra.mxu0 0.0
    %764 = vmatprep.subr.mxu0 0.0
    %765 = vmatpush1.msra.mxu0 0.0
    %766 = vmatprep.subr.mxu0 0.0
    %767 = vmatpush1.msra.mxu0 0.0
    %768 = vmatprep.subr.mxu0 0.0
    %769 = vmatpush1.msra.mxu0 %v694
    %770 = vmatprep.subr.mxu0 0.0
    %771 = vmatpush1.msra.mxu0 %v693
    %772 = vmatprep.subr.mxu0 0.0
    %773 = vmatpush2.msra.mxu0 0.0
    %774 = vmatprep.subr.mxu0 0.0
    %775 = vmatpush2.msra.mxu0 0.0
    %776 = vmatprep.subr.mxu0 0.0
    %777 = vmatpush2.msra.mxu0 0.0
    %778 = vmatprep.subr.mxu0 0.0
    %779 = vmatpush2.msra.mxu0 0.0
    %780 = vmatprep.subr.mxu0 0.0
    %781 = vmatpush2.msra.mxu0 0.0
    %782 = vmatprep.subr.mxu0 0.0
    %783 = vmatpush2.msra.mxu0 0.0
    %784 = vmatprep.subr.mxu0 0.0
    %785 = vmatpush2.msra.mxu0 0.0
    %786 = vmatprep.subr.mxu0 0.0
    %787 = vmatpush2.msra.mxu0 0.0
    %788 = vmatprep.subr.mxu0 0.0
    %789 = vmatpush2.msra.mxu0 0.0
    %790 = vmatprep.subr.mxu0 0.0
    %791 = vmatpush2.msra.mxu0 0.0
    %792 = vmatprep.subr.mxu0 0.0
    %793 = vmatpush2.msra.mxu0 0.0
    %794 = vmatprep.subr.mxu0 0.0
    %795 = vmatpush2.msra.mxu0 0.0
    %796 = vmatprep.subr.mxu0 0.0
    %797 = vmatpush2.msra.mxu0 0.0
    %798 = vmatprep.subr.mxu0 0.0
    %799 = vmatpush2.msra.mxu0 0.0
    %800 = vmatprep.subr.mxu0 0.0
    %801 = vmatpush2.msra.mxu0 0.0
    %802 = vmatprep.subr.mxu0 0.0
    %803 = vmatpush2.msra.mxu0 0.0
    %804 = vmatprep.mubr.f32.mxu0 0.0
    %805 = vmatmul.mubr.f32.gmra.mxu0 %v729
    %v806 = vpop.f32.mrf.mxu0
    %v807 = vadd.f32 0.0, %v806
    %v808 = vpop.f32.mrf.mxu0
    %809 = vmatprep.mubr.f32.mxu0 0.0
    %810 = vmatmul.mubr.f32.gmra.mxu0 %v732
    %v811 = vpop.f32.mrf.mxu0
    %v812 = vadd.f32 0.0, %v811
    %v813 = vpop.f32.mrf.mxu0
    %814 = vmatprep.mubr.f32.mxu0 0.0
    %815 = vmatmul.mubr.f32.gmra.mxu0 %v735
    %v816 = vpop.f32.mrf.mxu0
    %v817 = vadd.f32 0.0, %v816
    %v818 = vpop.f32.mrf.mxu0
    %819 = vmatprep.mubr.f32.mxu0 0.0
    %820 = vmatmul.mubr.f32.gmra.mxu0 %v738
    %v821 = vpop.f32.mrf.mxu0
    %v822 = vadd.f32 0.0, %v821
    %v823 = vpop.f32.mrf.mxu0
    %824 = vdwg.mxu0
    %v826 = vsel %vm236, %v142, 0
    %v829 = vsel %vm236, %v143, 0
    %v832 = vsel %vm236, %v144, 0
    %v835 = vsel %vm236, %v145, 0
    %837 = vmatprep.subr.mxu0 0.0
    %838 = vmatpush1.msra.mxu0 0.0
    %839 = vmatprep.subr.mxu0 0.0
    %840 = vmatpush1.msra.mxu0 0.0
    %841 = vmatprep.subr.mxu0 0.0
    %842 = vmatpush1.msra.mxu0 0.0
    %843 = vmatprep.subr.mxu0 0.0
    %844 = vmatpush1.msra.mxu0 0.0
    %845 = vmatprep.subr.mxu0 0.0
    %846 = vmatpush1.msra.mxu0 0.0
    %847 = vmatprep.subr.mxu0 0.0
    %848 = vmatpush1.msra.mxu0 0.0
    %849 = vmatprep.subr.mxu0 0.0
    %850 = vmatpush1.msra.mxu0 0.0
    %851 = vmatprep.subr.mxu0 0.0
    %852 = vmatpush1.msra.mxu0 0.0
    %853 = vmatprep.subr.mxu0 0.0
    %854 = vmatpush1.msra.mxu0 0.0
    %855 = vmatprep.subr.mxu0 0.0
    %856 = vmatpush1.msra.mxu0 0.0
    %857 = vmatprep.subr.mxu0 0.0
    %858 = vmatpush1.msra.mxu0 0.0
    %859 = vmatprep.subr.mxu0 0.0
    %860 = vmatpush1.msra.mxu0 0.0
    %861 = vmatprep.subr.mxu0 0.0
    %862 = vmatpush1.msra.mxu0 0.0
    %863 = vmatprep.subr.mxu0 0.0
    %864 = vmatpush1.msra.mxu0 0.0
    %865 = vmatprep.subr.mxu0 0.0
    %866 = vmatpush1.msra.mxu0 %v694
    %867 = vmatprep.subr.mxu0 0.0
    %868 = vmatpush1.msra.mxu0 %v693
    %869 = vmatprep.subr.mxu0 0.0
    %870 = vmatpush2.msra.mxu0 0.0
    %871 = vmatprep.subr.mxu0 0.0
    %872 = vmatpush2.msra.mxu0 0.0
    %873 = vmatprep.subr.mxu0 0.0
    %874 = vmatpush2.msra.mxu0 0.0
    %875 = vmatprep.subr.mxu0 0.0
    %876 = vmatpush2.msra.mxu0 0.0
    %877 = vmatprep.subr.mxu0 0.0
    %878 = vmatpush2.msra.mxu0 0.0
    %879 = vmatprep.subr.mxu0 0.0
    %880 = vmatpush2.msra.mxu0 0.0
    %881 = vmatprep.subr.mxu0 0.0
    %882 = vmatpush2.msra.mxu0 0.0
    %883 = vmatprep.subr.mxu0 0.0
    %884 = vmatpush2.msra.mxu0 0.0
    %885 = vmatprep.subr.mxu0 0.0
    %886 = vmatpush2.msra.mxu0 0.0
    %887 = vmatprep.subr.mxu0 0.0
    %888 = vmatpush2.msra.mxu0 0.0
    %889 = vmatprep.subr.mxu0 0.0
    %890 = vmatpush2.msra.mxu0 0.0
    %891 = vmatprep.subr.mxu0 0.0
    %892 = vmatpush2.msra.mxu0 0.0
    %893 = vmatprep.subr.mxu0 0.0
    %894 = vmatpush2.msra.mxu0 0.0
    %895 = vmatprep.subr.mxu0 0.0
    %896 = vmatpush2.msra.mxu0 0.0
    %897 = vmatprep.subr.mxu0 0.0
    %898 = vmatpush2.msra.mxu0 0.0
    %899 = vmatprep.subr.mxu0 0.0
    %900 = vmatpush2.msra.mxu0 0.0
    %901 = vmatprep.mubr.f32.mxu0 0.0
    %902 = vmatmul.mubr.f32.gmra.mxu0 %v826
    %v903 = vpop.f32.mrf.mxu0
    %v904 = vadd.f32 0.0, %v903
    %v905 = vpop.f32.mrf.mxu0
    %906 = vmatprep.mubr.f32.mxu0 0.0
    %907 = vmatmul.mubr.f32.gmra.mxu0 %v829
    %v908 = vpop.f32.mrf.mxu0
    %v909 = vadd.f32 0.0, %v908
    %v910 = vpop.f32.mrf.mxu0
    %911 = vmatprep.mubr.f32.mxu0 0.0
    %912 = vmatmul.mubr.f32.gmra.mxu0 %v832
    %v913 = vpop.f32.mrf.mxu0
    %v914 = vadd.f32 0.0, %v913
    %v915 = vpop.f32.mrf.mxu0
    %916 = vmatprep.mubr.f32.mxu0 0.0
    %917 = vmatmul.mubr.f32.gmra.mxu0 %v835
    %v918 = vpop.f32.mrf.mxu0
    %v919 = vadd.f32 0.0, %v918
    %v920 = vpop.f32.mrf.mxu0
    %921 = vdwg.mxu0
    %922 = vst [vmem:[#allocation14] sm:$0xff] %v807
    %923 = vst [vmem:[#allocation14 + $0x10] sm:$0xff] %v812
    %924 = vst [vmem:[#allocation14 + $0x20] sm:$0xff] %v817
    %925 = vst [vmem:[#allocation14 + $0x30] sm:$0xff] %v822
    %926 = vst [vmem:[#allocation14 + $0x8] sm:$0xff] %v904
    %927 = vst [vmem:[#allocation14 + $0x18] sm:$0xff] %v909
    %928 = vst [vmem:[#allocation14 + $0x28] sm:$0xff] %v914
    %929 = vst [vmem:[#allocation14 + $0x38] sm:$0xff] %v919
    %930 = vmatprep.subr.mxu0 0.0
    %931 = vmatpush1.msra.mxu0 %v726
    %932 = vmatprep.subr.mxu0 0.0
    %933 = vmatpush1.msra.mxu0 %v725
    %934 = vmatprep.subr.mxu0 0.0
    %935 = vmatpush1.msra.mxu0 %v724
    %936 = vmatprep.subr.mxu0 0.0
    %937 = vmatpush1.msra.mxu0 %v723
    %938 = vmatprep.subr.mxu0 0.0
    %939 = vmatpush1.msra.mxu0 %v722
    %940 = vmatprep.subr.mxu0 0.0
    %941 = vmatpush1.msra.mxu0 %v721
    %942 = vmatprep.subr.mxu0 0.0
    %943 = vmatpush1.msra.mxu0 %v720
    %944 = vmatprep.subr.mxu0 0.0
    %945 = vmatpush1.msra.mxu0 %v719
    %946 = vmatprep.subr.mxu0 0.0
    %947 = vmatpush1.msra.mxu0 %v718
    %948 = vmatprep.subr.mxu0 0.0
    %949 = vmatpush1.msra.mxu0 %v717
    %950 = vmatprep.subr.mxu0 0.0
    %951 = vmatpush1.msra.mxu0 %v716
    %952 = vmatprep.subr.mxu0 0.0
    %953 = vmatpush1.msra.mxu0 %v715
    %954 = vmatprep.subr.mxu0 0.0
    %955 = vmatpush1.msra.mxu0 %v714
    %956 = vmatprep.subr.mxu0 0.0
    %957 = vmatpush1.msra.mxu0 %v713
    %958 = vmatprep.subr.mxu0 0.0
    %959 = vmatpush1.msra.mxu0 %v712
    %960 = vmatprep.subr.mxu0 0.0
    %961 = vmatpush1.msra.mxu0 %v711
    %962 = vmatprep.subr.mxu0 0.0
    %963 = vmatpush2.msra.mxu0 0.0
    %964 = vmatprep.subr.mxu0 0.0
    %965 = vmatpush2.msra.mxu0 0.0
    %966 = vmatprep.subr.mxu0 0.0
    %967 = vmatpush2.msra.mxu0 0.0
    %968 = vmatprep.subr.mxu0 0.0
    %969 = vmatpush2.msra.mxu0 0.0
    %970 = vmatprep.subr.mxu0 0.0
    %971 = vmatpush2.msra.mxu0 0.0
    %972 = vmatprep.subr.mxu0 0.0
    %973 = vmatpush2.msra.mxu0 0.0
    %974 = vmatprep.subr.mxu0 0.0
    %975 = vmatpush2.msra.mxu0 0.0
    %976 = vmatprep.subr.mxu0 0.0
    %977 = vmatpush2.msra.mxu0 0.0
    %978 = vmatprep.subr.mxu0 0.0
    %979 = vmatpush2.msra.mxu0 0.0
    %980 = vmatprep.subr.mxu0 0.0
    %981 = vmatpush2.msra.mxu0 0.0
    %982 = vmatprep.subr.mxu0 0.0
    %983 = vmatpush2.msra.mxu0 0.0
    %984 = vmatprep.subr.mxu0 0.0
    %985 = vmatpush2.msra.mxu0 0.0
    %986 = vmatprep.subr.mxu0 0.0
    %987 = vmatpush2.msra.mxu0 0.0
    %988 = vmatprep.subr.mxu0 0.0
    %989 = vmatpush2.msra.mxu0 0.0
    %990 = vmatprep.subr.mxu0 0.0
    %991 = vmatpush2.msra.mxu0 0.0
    %992 = vmatprep.subr.mxu0 0.0
    %993 = vmatpush2.msra.mxu0 0.0
    %994 = vmatprep.mubr.f32.mxu0 0.0
    %995 = vmatmul.mubr.f32.gmra.mxu0 %v904
    %v996 = vpop.f32.mrf.mxu0
    %v997 = vadd.f32 0.0, %v996
    %v998 = vpop.f32.mrf.mxu0
    %999 = vmatprep.mubr.f32.mxu0 0.0
    %1000 = vmatmul.mubr.f32.gmra.mxu0 %v909
    %v1001 = vpop.f32.mrf.mxu0
    %v1002 = vadd.f32 0.0, %v1001
    %v1003 = vpop.f32.mrf.mxu0
    %1004 = vmatprep.mubr.f32.mxu0 0.0
    %1005 = vmatmul.mubr.f32.gmra.mxu0 %v914
    %v1006 = vpop.f32.mrf.mxu0
    %v1007 = vadd.f32 0.0, %v1006
    %v1008 = vpop.f32.mrf.mxu0
    %1009 = vmatprep.mubr.f32.mxu0 0.0
    %1010 = vmatmul.mubr.f32.gmra.mxu0 %v919
    %v1011 = vpop.f32.mrf.mxu0
    %v1012 = vadd.f32 0.0, %v1011
    %v1013 = vpop.f32.mrf.mxu0
    %1014 = vdwg.mxu0
    %1015 = vmatprep.subr.mxu0 0.0
    %1016 = vmatpush1.msra.mxu0 %v710
    %1017 = vmatprep.subr.mxu0 0.0
    %1018 = vmatpush1.msra.mxu0 %v709
    %1019 = vmatprep.subr.mxu0 0.0
    %1020 = vmatpush1.msra.mxu0 %v708
    %1021 = vmatprep.subr.mxu0 0.0
    %1022 = vmatpush1.msra.mxu0 %v707
    %1023 = vmatprep.subr.mxu0 0.0
    %1024 = vmatpush1.msra.mxu0 %v706
    %1025 = vmatprep.subr.mxu0 0.0
    %1026 = vmatpush1.msra.mxu0 %v705
    %1027 = vmatprep.subr.mxu0 0.0
    %1028 = vmatpush1.msra.mxu0 %v704
    %1029 = vmatprep.subr.mxu0 0.0
    %1030 = vmatpush1.msra.mxu0 %v703
    %1031 = vmatprep.subr.mxu0 0.0
    %1032 = vmatpush1.msra.mxu0 %v702
    %1033 = vmatprep.subr.mxu0 0.0
    %1034 = vmatpush1.msra.mxu0 %v701
    %1035 = vmatprep.subr.mxu0 0.0
    %1036 = vmatpush1.msra.mxu0 %v700
    %1037 = vmatprep.subr.mxu0 0.0
    %1038 = vmatpush1.msra.mxu0 %v699
    %1039 = vmatprep.subr.mxu0 0.0
    %1040 = vmatpush1.msra.mxu0 %v698
    %1041 = vmatprep.subr.mxu0 0.0
    %1042 = vmatpush1.msra.mxu0 %v697
    %1043 = vmatprep.subr.mxu0 0.0
    %1044 = vmatpush1.msra.mxu0 %v696
    %1045 = vmatprep.subr.mxu0 0.0
    %1046 = vmatpush1.msra.mxu0 %v695
    %1047 = vmatprep.subr.mxu0 0.0
    %1048 = vmatpush2.msra.mxu0 0.0
    %1049 = vmatprep.subr.mxu0 0.0
    %1050 = vmatpush2.msra.mxu0 0.0
    %1051 = vmatprep.subr.mxu0 0.0
    %1052 = vmatpush2.msra.mxu0 0.0
    %1053 = vmatprep.subr.mxu0 0.0
    %1054 = vmatpush2.msra.mxu0 0.0
    %1055 = vmatprep.subr.mxu0 0.0
    %1056 = vmatpush2.msra.mxu0 0.0
    %1057 = vmatprep.subr.mxu0 0.0
    %1058 = vmatpush2.msra.mxu0 0.0
    %1059 = vmatprep.subr.mxu0 0.0
    %1060 = vmatpush2.msra.mxu0 0.0
    %1061 = vmatprep.subr.mxu0 0.0
    %1062 = vmatpush2.msra.mxu0 0.0
    %1063 = vmatprep.subr.mxu0 0.0
    %1064 = vmatpush2.msra.mxu0 0.0
    %1065 = vmatprep.subr.mxu0 0.0
    %1066 = vmatpush2.msra.mxu0 0.0
    %1067 = vmatprep.subr.mxu0 0.0
    %1068 = vmatpush2.msra.mxu0 0.0
    %1069 = vmatprep.subr.mxu0 0.0
    %1070 = vmatpush2.msra.mxu0 0.0
    %1071 = vmatprep.subr.mxu0 0.0
    %1072 = vmatpush2.msra.mxu0 0.0
    %1073 = vmatprep.subr.mxu0 0.0
    %1074 = vmatpush2.msra.mxu0 0.0
    %1075 = vmatprep.subr.mxu0 0.0
    %1076 = vmatpush2.msra.mxu0 0.0
    %1077 = vmatprep.subr.mxu0 0.0
    %1078 = vmatpush2.msra.mxu0 0.0
    %1079 = vmatprep.mubr.f32.mxu0 0.0
    %1080 = vmatmul.mubr.f32.gmra.mxu0 %v807
    %v1081 = vpop.f32.mrf.mxu0
    %v1082 = vadd.f32 %v997, %v1081
    %v1083 = vpop.f32.mrf.mxu0
    %1084 = vmatprep.mubr.f32.mxu0 0.0
    %1085 = vmatmul.mubr.f32.gmra.mxu0 %v812
    %v1086 = vpop.f32.mrf.mxu0
    %v1087 = vadd.f32 %v1002, %v1086
    %v1088 = vpop.f32.mrf.mxu0
    %1089 = vmatprep.mubr.f32.mxu0 0.0
    %1090 = vmatmul.mubr.f32.gmra.mxu0 %v817
    %v1091 = vpop.f32.mrf.mxu0
    %v1092 = vadd.f32 %v1007, %v1091
    %v1093 = vpop.f32.mrf.mxu0
    %1094 = vmatprep.mubr.f32.mxu0 0.0
    %1095 = vmatmul.mubr.f32.gmra.mxu0 %v822
    %v1096 = vpop.f32.mrf.mxu0
    %v1097 = vadd.f32 %v1012, %v1096
    %v1098 = vpop.f32.mrf.mxu0
    %1099 = vdwg.mxu0
    %v1101 = vlaneseq
    %v1102 = vshrl.u32 %v1101, 7
    %v1103 = vsub.s32 0, %v1102
    %v1104 = vrot.slane %v727, %v1103
    %v1106 = vadd.f32 %v1082, %v1104
    %v1107 = vadd.f32 %v1087, %v1104
    %v1108 = vadd.f32 %v1092, %v1104
    %v1109 = vadd.f32 %v1097, %v1104
    %1110 = vst [vmem:[#allocation13] sm:$0xff] %v1106
    %1111 = vst [vmem:[#allocation13 + $0x8] sm:$0xff] %v1107
    %1112 = vst [vmem:[#allocation13 + $0x10] sm:$0xff] %v1108
    %1113 = vst [vmem:[#allocation13 + $0x18] sm:$0xff] %v1109
    // Predicated region
    $region86: #{tpu_custom_call.1} parent=1 // pred_check
      _
    $region87: #{tpu_custom_call.1} parent=1 // pred_check_branch
      %1115 = sbr.rel (0) target = $region89
    $region88: #{tpu_custom_call.1} parent=1 // pred_region
      %s1117 = ssub.s32 512, 512
      %1118 = vsyncadd [#allocation4], %s1117
      %s1119 = sshll.u32 [#allocation13], 4
      %s1120 = int_to_ptr.vmem [resolvable:$true] %s1119
      %1125 = dma.vmem_to_hbm [thread:$0]  %s1120, 512, %s15, [#allocation4], 128, 128, 8
    $region89: #{tpu_custom_call.1} parent=1 // pred_fallthru
      _
    // Predicated region
    $region90: #{tpu_custom_call.1} parent=1 // pred_check
      _
    $region91: #{tpu_custom_call.1} parent=1 // pred_check_branch
      %1127 = sbr.rel (0) target = $region93
    $region92: #{tpu_custom_call.1} parent=1 // pred_region
      %s1129 = ssub.s32 1024, 1024
      %1130 = vsyncadd [#allocation15], %s1129
      %s1131 = sshll.u32 [#allocation14], 4
      %s1132 = int_to_ptr.vmem [resolvable:$true] %s1131
      %1137 = dma.vmem_to_hbm [thread:$0]  %s1132, 1024, %s16, [#allocation15], 256, 256, 16
    $region93: #{tpu_custom_call.1} parent=1 // pred_fallthru
      _
    // Predicated region
    $region94: #{tpu_custom_call.1} parent=1 // pred_check
      _
    $region95: #{tpu_custom_call.1} parent=1 // pred_check_branch
      %1139 = sbr.rel (0) target = $region97
    $region96: #{tpu_custom_call.1} parent=1 // pred_region
      %1140 = dma.done [#allocation4], 512
    $region97: #{tpu_custom_call.1} parent=1 // pred_fallthru
      _
    // Predicated region
    $region98: #{tpu_custom_call.1} parent=1 // pred_check
      _
    $region99: #{tpu_custom_call.1} parent=1 // pred_check_branch
      %1142 = sbr.rel (0) target = $region101
    $region100: #{tpu_custom_call.1} parent=1 // pred_region
      %1143 = dma.done [#allocation15], 1024
    $region101: #{tpu_custom_call.1} parent=1 // pred_fallthru
      _
    %1144 = vsyncpa [#allocation3], 1
    %1145 = vsyncpa [#allocation6], 1
    %1146 = vsyncpa [#allocation9], 1
    %1147 = vsyncpa [#allocation12], 1
    %1148 = vsyncpa [#allocation4], 1
    %1149 = vsyncpa [#allocation15], 1

</llo_original>
